<compile_context>
chip_gen: v5e
topology: v5e:2x2
jax: 0.10.0
libtpu: 0.0.40
codegen_flags: <defaults>
</compile_context>

<pallas_src>
import functools

import jax
import jax.numpy as jnp
import numpy as np
from jax import lax
from jax.experimental import pallas as pl
from jax.experimental.pallas import tpu as pltpu


def _round_up(n, m):
    return ((n + m - 1) // m) * m


def pam_kernel(x_ref, w_ref, b_ref, gamma_ref, o_ref, qkv_ref, *,
               c8, koff, voff, tq, compute_dtype):
    f32 = jnp.float32
    C = x_ref.shape[1]             # channels
    t = pl.program_id(1)           # query-tile index within this batch

    # ---- once per batch: fused Q/K/V projection of the full feature map ----
    # w rows = [Wq | 0-pad | Wk | 0-pad | Wv | 0-row]; bias last entry = 1.0,
    # so the last row of the projection is a constant 1.0 (ones-row used for
    # the softmax denominators in the attn@V matmul below).
    @pl.when(t == 0)
    def _():
        x_all = x_ref[0].astype(compute_dtype)                       # (C, HW)
        proj = jnp.dot(w_ref[...], x_all,
                       preferred_element_type=f32) + b_ref[...]      # (R, HW) f32
        qkv_ref[...] = proj.astype(compute_dtype)                    # cast once per batch

    col = pl.multiple_of(t * tq, tq)
    q_t = qkv_ref[pl.ds(0, c8), pl.ds(col, tq)]                      # (C8, TQ)
    k = qkv_ref[pl.ds(koff, c8), :]                                  # (C8, HW)
    v_aug = qkv_ref[pl.ds(voff, C + 1), :]                           # (C+1, HW), last row == 1

    # energy[i, j] = <q_i, k_j>  (transposed-A contraction, channel-major).
    energy = lax.dot_general(
        q_t, k, dimension_numbers=(((0,), (0,)), ((), ())),
        preferred_element_type=f32)                                  # (TQ, HW)
    m = jnp.max(energy, axis=-1, keepdims=True)
    p = jnp.exp(energy - m)                                          # (TQ, HW) f32, un-normalized

    # out_aug[c, i] = sum_j v_aug[c, j] * p[i, j]  (transposed-B contraction).
    # Last row of out_aug == sum_j p[i, j] == softmax denominator per query.
    out_aug = lax.dot_general(
        v_aug, p.astype(compute_dtype),
        dimension_numbers=(((1,), (1,)), ((), ())),
        preferred_element_type=f32)                                  # (C+1, TQ)
    out_un = out_aug[:C]                                             # (C, TQ)
    denom = out_aug[C:C + 1]                                         # (1, TQ)
    inv = pl.reciprocal(denom, approx=False)                         # exact: (1,TQ) is free

    x_t = x_ref[0, :, pl.ds(col, tq)]                                # (C, TQ) f32 residual
    # Deferred normalization: O(C*TQ) multiply instead of O(TQ*HW) divide.
    o_ref[0] = gamma_ref[0] * (out_un * inv) + x_t                   # lane-dense store


def pam_forward(x_nchw, wq, bq, wk, bk, wv, bv, gamma, *,
                tile_q=128, compute_dtype=jnp.bfloat16,
                resident_buffers=None, vmem_limit_cap=64 << 20):
    """PAM forward.

    x_nchw: (B, C, H, W) f32; wq/wk: (C//8, C); wv: (C, C); biases 1-D;
    gamma: (1,).

    tile_q: query-tile size (multiple of 128, or == H*W).  Sweep up to
      256-512 on v5e/v6e (128 MiB VMEM, raise vmem_limit_cap to ~96 MiB);
      keep 128-256 on v7x (64 MiB VMEM).
    compute_dtype: MXU operand dtype (bf16 default; f32 accumulate, f32
      softmax / normalization / residual either way).
    resident_buffers: if set (e.g. 1 on v7x), applies
      pipeline_mode=pl.Buffered(n) to the resident x / weight / bias blocks
      so they are not double-buffered.
    """
    B, C, H, W = x_nchw.shape
    HW = H * W
    C8 = wq.shape[0]
    TQ = min(tile_q, HW)
    assert HW % TQ == 0, "H*W must be a multiple of the query tile"
    assert TQ % 128 == 0 or TQ == HW, "query tile must be lane-dense"

    # NCHW -> (B, C, HW): a free reshape, no HBM transpose.
    x_cm = x_nchw.reshape(B, C, HW)

    # Fused Q/K/V weight.  Offsets rounded to 16 rows so bf16 (16,128)-packed
    # row slices of the scratch stay copy-free (also fine for f32).
    koff = _round_up(C8, 16)
    voff = _round_up(koff + C8, 16)
    R = voff + C + 1
    wqkv = (jnp.zeros((R, C), jnp.float32)
            .at[:C8].set(wq)
            .at[koff:koff + C8].set(wk)
            .at[voff:voff + C].set(wv)).astype(compute_dtype)
    bqkv = (jnp.zeros((R,), jnp.float32)
            .at[:C8].set(bq)
            .at[koff:koff + C8].set(bk)
            .at[voff:voff + C].set(bv)
            .at[R - 1].set(1.0))

    # VMEM budget sized from the actual buffers (clamped; raise the cap on
    # v5e/v6e for large shapes, lower toward ~48 MiB on v7x if needed).
    cds = jnp.dtype(compute_dtype).itemsize
    n_res = 2 if resident_buffers is None else max(int(resident_buffers), 1)
    est = (n_res * C * HW * 4                      # resident x block(s)
           + 2 * C * TQ * 4                        # double-buffered output tiles
           + n_res * (R * C * cds + R * 4)         # fused weight + bias
           + R * HW * cds                          # persistent Q/K/V scratch
           + R * HW * 4                            # f32 projection temp (t == 0)
           + 3 * TQ * HW * 4                       # energy / p temporaries
           + (R + C8) * TQ * 4)                    # q tile, out_aug
    vmem_limit_bytes = int(min(max(int(1.5 * est) + (4 << 20), 32 << 20),
                               vmem_limit_cap))

    def resident_spec(shape, index_map):
        if resident_buffers is None:
            return pl.BlockSpec(shape, index_map)
        return pl.BlockSpec(shape, index_map,
                            pipeline_mode=pl.Buffered(resident_buffers))

    kernel = functools.partial(pam_kernel, c8=C8, koff=koff, voff=voff,
                               tq=TQ, compute_dtype=compute_dtype)

    out_cm = pl.pallas_call(
        kernel,
        out_shape=jax.ShapeDtypeStruct((B, C, HW), jnp.float32),
        grid_spec=pltpu.PrefetchScalarGridSpec(
            num_scalar_prefetch=0,
            grid=(B, HW // TQ),
            in_specs=[
                resident_spec((1, C, HW), lambda b, t: (b, 0, 0)),   # x (resident per b)
                resident_spec((R, C), lambda b, t: (0, 0)),          # fused [Wq;Wk;Wv;ones]
                resident_spec((R, 1), lambda b, t: (0, 0)),          # fused bias (col)
                pl.BlockSpec(memory_space=pltpu.MemorySpace.SMEM),   # gamma (scalar)
            ],
            out_specs=pl.BlockSpec((1, C, TQ), lambda b, t: (b, 0, t)),
            scratch_shapes=[pltpu.VMEM((R, HW), compute_dtype)],     # per-batch Q/K/V_aug
        ),
        compiler_params=pltpu.CompilerParams(
            # Query-tile axis is "arbitrary": the scratch projection is
            # computed at t == 0 and reused for t > 0.  Batch axis stays
            # "parallel" so v7x's two TensorCores both get work.
            dimension_semantics=("parallel", "arbitrary"),
            vmem_limit_bytes=vmem_limit_bytes),
    )(x_cm, wqkv, bqkv[:, None], gamma)

    # (B, C, HW) -> (B, C, H, W): free reshape, no transpose.
    return out_cm.reshape(B, C, H, W)


def pam_reference(x, wq, bq, wk, bk, wv, bv, gamma):
    """Pure-JAX mirror of the PyTorch forward (NCHW)."""
    B, C, H, W = x.shape
    HW = H * W

    def conv1x1(xx, w, b):
        y = jnp.einsum('bchw,oc->bohw', xx, w)          # (B, Co, H, W)
        return y.reshape(B, w.shape[0], HW) + b[None, :, None]

    q = conv1x1(x, wq, bq)                               # (B, C//8, HW)
    k = conv1x1(x, wk, bk)                               # (B, C//8, HW)
    v = conv1x1(x, wv, bv)                               # (B, C, HW)
    energy = jnp.einsum('bci,bcj->bij', q, k)            # (B, HW, HW)
    attn = jax.nn.softmax(energy, axis=-1)
    out = jnp.einsum('bcj,bij->bci', v, attn).reshape(B, C, H, W)
    return gamma[0] * out + x


if __name__ == "__main__":
    B, C, H, W = 2, 32, 16, 16          # in_dim=32 so in_dim // 8 = 4
    C8 = C // 8

    key = jax.random.PRNGKey(0)
    k1, k2, k3, k4, k5, k6, k7 = jax.random.split(key, 7)
    x = jax.random.normal(k1, (B, C, H, W), jnp.float32)
    # Conv2d(k=1) weights are (out, in, 1, 1) in torch; stored here as (out, in).
    wq = jax.random.normal(k2, (C8, C), jnp.float32) * 0.1
    bq = jax.random.normal(k3, (C8,), jnp.float32) * 0.1
    wk = jax.random.normal(k4, (C8, C), jnp.float32) * 0.1
    bk = jax.random.normal(k5, (C8,), jnp.float32) * 0.1
    wv = jax.random.normal(k6, (C, C), jnp.float32) * 0.1
    bv = jax.random.normal(k7, (C,), jnp.float32) * 0.1
    # nn.Parameter(torch.zeros(1)) would make out == x; use a deterministic
    # nonzero gamma so the attention path is actually exercised/verified.
    gamma = jnp.full((1,), 0.5, jnp.float32)

    ref = pam_reference(x, wq, bq, wk, bk, wv, bv, gamma)

    # f32 MXU path (tight tolerance).
    out_f32 = jax.block_until_ready(
        pam_forward(x, wq, bq, wk, bk, wv, bv, gamma,
                    tile_q=128, compute_dtype=jnp.float32))
    np.testing.assert_allclose(np.asarray(out_f32), np.asarray(ref),
                               rtol=1e-4, atol=1e-4)

    # Default path: bf16 MXU operands (f32 accumulate / softmax / residual).
    out_bf16 = jax.block_until_ready(
        pam_forward(x, wq, bq, wk, bk, wv, bv, gamma, tile_q=128))
    np.testing.assert_allclose(np.asarray(out_bf16), np.asarray(ref),
                               rtol=3e-2, atol=3e-2)

    print("KERNEL_OK")
</pallas_src>

<mosaic_0001>
module attributes {stable_mosaic.version = 11 : i64} {
  func.func @pam_kernel(%arg0: i32, %arg1: i32, %arg2: memref<1x32x256xf32, #tpu.memory_space<vmem>>, %arg3: memref<65x32xf32, #tpu.memory_space<vmem>>, %arg4: memref<65x1xf32, #tpu.memory_space<vmem>>, %arg5: memref<1xf32, #tpu.memory_space<smem>>, %arg6: memref<1x32x128xf32, #tpu.memory_space<vmem>>, %arg7: memref<65x256xf32, #tpu.memory_space<vmem>>) attributes {dimension_semantics = [#tpu.dimension_semantics<parallel>, #tpu.dimension_semantics<arbitrary>], iteration_bounds = array<i64: 2, 2>, scalar_prefetch = 0 : i64, scratch_operands = 1 : i64, tpu.core_type = #tpu.core_type<tc>, window_params = [{transform_indices = @transform_0, window_bounds = array<i64: 1, 32, 256>}, {pipeline_mode = #tpu.pipeline_mode<synchronous>, transform_indices = @transform_1, window_bounds = array<i64: 65, 32>}, {pipeline_mode = #tpu.pipeline_mode<synchronous>, transform_indices = @transform_2, window_bounds = array<i64: 65, 1>}, {transform_indices = @transform_3, window_bounds = array<i64: 1>}, {transform_indices = @transform_4, window_bounds = array<i64: 1, 32, 128>}]} {
    %c0_i32 = arith.constant 0 : i32
    %0 = arith.cmpi eq, %arg1, %c0_i32 : i32
    %1 = arith.extui %0 : i1 to i32
    %c0_i32_0 = arith.constant 0 : i32
    %2 = arith.cmpi ne, %1, %c0_i32_0 : i32
    scf.if %2 {
      %c0_11 = arith.constant 0 : index
      %c0_12 = arith.constant 0 : index
      %c0_13 = arith.constant 0 : index
      %31 = vector.load %arg2[%c0_11, %c0_12, %c0_13] : memref<1x32x256xf32, #tpu.memory_space<vmem>>, vector<1x32x256xf32>
      %32 = vector.shape_cast %31 : vector<1x32x256xf32> to vector<32x256xf32>
      %c0_14 = arith.constant 0 : index
      %c0_15 = arith.constant 0 : index
      %33 = vector.load %arg3[%c0_14, %c0_15] : memref<65x32xf32, #tpu.memory_space<vmem>>, vector<65x32xf32>
      %cst_16 = arith.constant dense<0.000000e+00> : vector<65x256xf32>
      %34 = tpu.matmul %33, %32, %cst_16 {dimension_numbers = #tpu.dot_dimension_numbers<[1], [0], [0], [1], [0, 0, 1, 1], [], []>} : vector<65x32xf32>, vector<32x256xf32>, vector<65x256xf32> -> vector<65x256xf32>
      %c0_17 = arith.constant 0 : index
      %c0_18 = arith.constant 0 : index
      %35 = vector.load %arg4[%c0_17, %c0_18] : memref<65x1xf32, #tpu.memory_space<vmem>>, vector<65x1xf32>
      %36 = vector.broadcast %35 : vector<65x1xf32> to vector<65x256xf32>
      %37 = arith.addf %34, %36 : vector<65x256xf32>
      %c0_19 = arith.constant 0 : index
      %c0_20 = arith.constant 0 : index
      %38 = vector.load %arg7[%c0_19, %c0_20] : memref<65x256xf32, #tpu.memory_space<vmem>>, vector<65x256xf32>
      tpu.vector_store %arg7[%c0_19, %c0_20], %37 {strides = array<i32>} : memref<65x256xf32, #tpu.memory_space<vmem>>, vector<65x256xf32>,
    } else {
    }
    %c128_i32 = arith.constant 128 : i32
    %3 = arith.muli %arg1, %c128_i32 : i32
    %4 = tpu.assume_multiple %3, 128 : i32
    %c0 = arith.constant 0 : index
    %5 = arith.index_cast %4 : i32 to index
    %6 = vector.load %arg7[%c0, %5] : memref<65x256xf32, #tpu.memory_space<vmem>>, vector<4x128xf32>
    %c16 = arith.constant 16 : index
    %c0_1 = arith.constant 0 : index
    %7 = vector.load %arg7[%c16, %c0_1] : memref<65x256xf32, #tpu.memory_space<vmem>>, vector<4x256xf32>
    %c32 = arith.constant 32 : index
    %c0_2 = arith.constant 0 : index
    %8 = vector.load %arg7[%c32, %c0_2] : memref<65x256xf32, #tpu.memory_space<vmem>>, vector<33x256xf32>
    %cst = arith.constant dense<0.000000e+00> : vector<128x256xf32>
    %9 = tpu.matmul %6, %7, %cst {dimension_numbers = #tpu.dot_dimension_numbers<[0], [0], [1], [1], [0, 1, 1, 1], [], []>} : vector<4x128xf32>, vector<4x256xf32>, vector<128x256xf32> -> vector<128x256xf32>
    %cst_3 = arith.constant dense<0xFF800000> : vector<128xf32>
    %10 = vector.multi_reduction <maximumf>, %9, %cst_3 [1] : vector<128x256xf32> to vector<128xf32>
    %11 = vector.shape_cast %10 : vector<128xf32> to vector<128x1xf32>
    %12 = vector.broadcast %11 : vector<128x1xf32> to vector<128x256xf32>
    %13 = arith.subf %9, %12 : vector<128x256xf32>
    %14 = math.exp %13 : vector<128x256xf32>
    %cst_4 = arith.constant dense<0.000000e+00> : vector<33x128xf32>
    %15 = tpu.matmul %8, %14, %cst_4 {dimension_numbers = #tpu.dot_dimension_numbers<[1], [1], [0], [0], [0, 0, 1, 0], [], []>} : vector<33x256xf32>, vector<128x256xf32>, vector<33x128xf32> -> vector<33x128xf32>
    %16 = vector.extract_strided_slice %15 {offsets = [0, 0], sizes = [32, 128], strides = [1, 1]} : vector<33x128xf32> to vector<32x128xf32>
    %17 = vector.extract_strided_slice %15 {offsets = [32, 0], sizes = [1, 128], strides = [1, 1]} : vector<33x128xf32> to vector<1x128xf32>
    %18 = tpu.reciprocal %17 : vector<1x128xf32> -> vector<1x128xf32>
    %c0_5 = arith.constant 0 : index
    %c0_6 = arith.constant 0 : index
    %19 = arith.index_cast %4 : i32 to index
    %20 = vector.load %arg2[%c0_5, %c0_6, %19] : memref<1x32x256xf32, #tpu.memory_space<vmem>>, vector<1x32x128xf32>
    %21 = vector.shape_cast %20 : vector<1x32x128xf32> to vector<32x128xf32>
    %c0_7 = arith.constant 0 : index
    %22 = memref.load %arg5[%c0_7] : memref<1xf32, #tpu.memory_space<smem>>
    %23 = vector.broadcast %18 : vector<1x128xf32> to vector<32x128xf32>
    %24 = arith.mulf %16, %23 : vector<32x128xf32>
    %25 = vector.broadcast %22 : f32 to vector<32x128xf32>
    %26 = arith.mulf %25, %24 : vector<32x128xf32>
    %27 = arith.addf %26, %21 : vector<32x128xf32>
    %c0_8 = arith.constant 0 : index
    %c0_9 = arith.constant 0 : index
    %c0_10 = arith.constant 0 : index
    %28 = vector.load %arg6[%c0_8, %c0_9, %c0_10] : memref<1x32x128xf32, #tpu.memory_space<vmem>>, vector<1x32x128xf32>
    %29 = vector.shape_cast %28 : vector<1x32x128xf32> to vector<32x128xf32>
    %30 = vector.shape_cast %27 : vector<32x128xf32> to vector<1x32x128xf32>
    tpu.vector_store %arg6[%c0_8, %c0_9, %c0_10], %30 {strides = array<i32>} : memref<1x32x128xf32, #tpu.memory_space<vmem>>, vector<1x32x128xf32>,
    return
  }
  func.func @transform_0(%arg0: i32, %arg1: i32) -> (i32, i32, i32) {
    %c0_i32 = arith.constant 0 : i32
    %c0_i32_0 = arith.constant 0 : i32
    %c0_i32_1 = arith.constant 0 : i32
    return %arg0, %c0_i32, %c0_i32_0 : i32, i32, i32
  }
  func.func @transform_1(%arg0: i32, %arg1: i32) -> (i32, i32) {
    %c0_i32 = arith.constant 0 : i32
    %c0_i32_0 = arith.constant 0 : i32
    %c0_i32_1 = arith.constant 0 : i32
    return %c0_i32, %c0_i32_0 : i32, i32
  }
  func.func @transform_2(%arg0: i32, %arg1: i32) -> (i32, i32) {
    %c0_i32 = arith.constant 0 : i32
    %c0_i32_0 = arith.constant 0 : i32
    %c0_i32_1 = arith.constant 0 : i32
    return %c0_i32, %c0_i32_0 : i32, i32
  }
  func.func @transform_3(%arg0: i32, %arg1: i32) -> i32 {
    %c0_i32 = arith.constant 0 : i32
    %c0_i32_0 = arith.constant 0 : i32
    return %c0_i32 : i32
  }
  func.func @transform_4(%arg0: i32, %arg1: i32) -> (i32, i32, i32) {
    %c0_i32 = arith.constant 0 : i32
    %c0_i32_0 = arith.constant 0 : i32
    return %arg0, %c0_i32, %arg1 : i32, i32, i32
  }
}

</mosaic_0001>

<llo_original>
// kernel: tpu_custom_call.1
$region0: #{tpu_custom_call.1}
  #allocation0 [shape = 'u32[]', space=smem, size = 0x4, offset = 0x4, fixed_abs, tag = 'smem constant byte address 0x4 - core index']
  #allocation1 [shape = 'u32[72,128]{1,0:T(1,128)}', space=vmem, size = 0x9000, scoped, tag = 'internal scratch']
  #allocation2 [shape = 'f32[65,256]{1,0:T(8,128)}', space=vmem, size = 0x12000, scoped, tag = 'scratch operand']
  #allocation3 [shape = 'f32[1]{0:T(128)S(6)}', space=smem, size = 0x200, scoped, tag = 'scoped memory for tpu_custom_call.1']
  %s0 = inlined_call_operand.vmem [shape: f32[2,32,256], index: 0, kind: input, shape index: {}]
  %s1 = inlined_call_operand.vmem [shape: f32[65,32], index: 1, kind: input, shape index: {}]
  %s2 = inlined_call_operand.vmem [shape: f32[65,1], index: 2, kind: input, shape index: {}]
  %s3 = inlined_call_operand.<no memory space> [shape: f32[1], index: 3, kind: input, shape index: {}]
  %s4 = inlined_call_operand.hbm [shape: f32[2,32,256], index: 4, kind: output, shape index: {}]
  %s5 = sld [smem:[#allocation0]]
  $region53: #{tpu_custom_call.1} parent=0
    _
  %s7 = ssub.s32 1, %s5
  %s8 = scalar_select 0, %s7, %s5
  %9 = sst [smem:[#allocation3]] %s3
  $region1: #{tpu_custom_call.1} parent=0
    #allocation4 [shape = 'u8[32768]{0}', space=vmem, size = 0x8000, scoped, tag = 'output window, operand 0']
    #allocation5 [shape = 's32[2]{0}', space=sflag, size = 0x8, scoped, tag = 'scoped memory for tpu_custom_call.1']
    %10 = vsyncpa [#allocation5], 0
    %s11 = scalar_lea.sflag [#allocation5], 1
    %12 = vsyncpa %s11, 0
    loop: start=0, step=1, limit=6
    $region2: #{tpu_custom_call.1} parent=1 // loop_pre_header
      _
    $region3: #{tpu_custom_call.1} parent=1 // loop_header
      %s14 = sphi 0, %s18
      %p15 = scmp.ge.s32.totalorder %s14, 6
      %s21 = sphi 0, %s33
      %s22 = sphi 0, %s29
      %s23 = sphi 0, %s21
      %s24 = sphi 0, %s22
      %s25 = sphi 0, %s23
      %s26 = sphi 0, %s24
      %s36 = sphi 0, %s38
      %s39 = sphi 0, %s36
      %s40 = sphi 0, %s39
      %s56 = sphi 0, %s40
      %s60 = sphi 0, %s60
      %s62 = sphi 0, %s60
      %s63 = sphi 0, %s62
      %s77 = sphi 0, %s63
      %s81 = sphi 0, %s81
      %s83 = sphi 0, %s81
      %s84 = sphi 0, %s83
      %s98 = sphi 0, %s84
      %s102 = sphi 0, %s102
      %s104 = sphi 0, %s102
      %s105 = sphi 0, %s104
      %s119 = sphi 0, %s105
      %s127 = sphi 0, %s129
      %s130 = sphi 0, %s127
      %s131 = sphi 0, %s130
      %s147 = sphi 0, %s131
    $region4: #{tpu_custom_call.1} parent=1 // loop_header_branch
      %17 = sbr.rel (%p15) target = $region8
    $region5: #{tpu_custom_call.1} parent=1 // loop_body
      %s19 = ssub.s32 %s14, 1
      %s20 = ssub.s32 %s14, 2
      %s27 = sadd.s32 1, %s22
      %p28 = scmp.ge.s32.totalorder %s27, 2
      %s29 = scalar_select %p28, 0, %s27
      %s30 = sadd.s32 1, %s21
      %s31 = scalar_select %p28, %s30, %s21
      %p32 = scmp.ge.s32.totalorder %s31, 2
      %s33 = scalar_select %p32, 0, %s31
      %s34 = ssub.s32 %s21, %s33
      %p35 = scmp.eq.s32.totalorder %s34, 0
      %s37 = sadd.s32 %s36, 1
      %s38 = scalar_select %p35, %s36, %s37
      %p41 = pneg %p35
      %p42 = scmp.eq.s32.totalorder %s14, 3
      %p43 = por %p41, %p42
      %p44 = scmp.ne.s32.totalorder %s36, %s39
      %p45 = scmp.eq.s32.totalorder %s14, 0
      %p46 = por %p44, %p45
      %p47 = scmp.ne.s32.totalorder %s36, %s39
      %p48 = scmp.eq.s32.totalorder %s19, 3
      %p49 = por %p47, %p48
      %p50 = scmp.ne.s32.totalorder %s39, %s40
      %p51 = scmp.eq.s32.totalorder %s19, 0
      %p52 = por %p50, %p51
      %p53 = scmp.ne.s32.totalorder %s39, %s40
      %p54 = scmp.eq.s32.totalorder %s20, 3
      %p55 = por %p53, %p54
      %p57 = scmp.ne.s32.totalorder %s40, %s56
      %p58 = scmp.eq.s32.totalorder %s20, 0
      %p59 = por %p57, %p58
      %s61 = sadd.s32 %s60, 1
      %p64 = scmp.eq.s32.totalorder %s14, 3
      %p65 = scmp.ne.s32.totalorder %s60, %s62
      %p66 = scmp.eq.s32.totalorder %s14, 0
      %p67 = por %p65, %p66
      %p68 = scmp.ne.s32.totalorder %s60, %s62
      %p69 = scmp.eq.s32.totalorder %s19, 3
      %p70 = por %p68, %p69
      %p71 = scmp.ne.s32.totalorder %s62, %s63
      %p72 = scmp.eq.s32.totalorder %s19, 0
      %p73 = por %p71, %p72
      %p74 = scmp.ne.s32.totalorder %s62, %s63
      %p75 = scmp.eq.s32.totalorder %s20, 3
      %p76 = por %p74, %p75
      %p78 = scmp.ne.s32.totalorder %s63, %s77
      %p79 = scmp.eq.s32.totalorder %s20, 0
      %p80 = por %p78, %p79
      %s82 = sadd.s32 %s81, 1
      %p85 = scmp.eq.s32.totalorder %s14, 3
      %p86 = scmp.ne.s32.totalorder %s81, %s83
      %p87 = scmp.eq.s32.totalorder %s14, 0
      %p88 = por %p86, %p87
      %p89 = scmp.ne.s32.totalorder %s81, %s83
      %p90 = scmp.eq.s32.totalorder %s19, 3
      %p91 = por %p89, %p90
      %p92 = scmp.ne.s32.totalorder %s83, %s84
      %p93 = scmp.eq.s32.totalorder %s19, 0
      %p94 = por %p92, %p93
      %p95 = scmp.ne.s32.totalorder %s83, %s84
      %p96 = scmp.eq.s32.totalorder %s20, 3
      %p97 = por %p95, %p96
      %p99 = scmp.ne.s32.totalorder %s84, %s98
      %p100 = scmp.eq.s32.totalorder %s20, 0
      %p101 = por %p99, %p100
      %s103 = sadd.s32 %s102, 1
      %p106 = scmp.eq.s32.totalorder %s14, 3
      %p107 = scmp.ne.s32.totalorder %s102, %s104
      %p108 = scmp.eq.s32.totalorder %s14, 0
      %p109 = por %p107, %p108
      %p110 = scmp.ne.s32.totalorder %s102, %s104
      %p111 = scmp.eq.s32.totalorder %s19, 3
      %p112 = por %p110, %p111
      %p113 = scmp.ne.s32.totalorder %s104, %s105
      %p114 = scmp.eq.s32.totalorder %s19, 0
      %p115 = por %p113, %p114
      %p116 = scmp.ne.s32.totalorder %s104, %s105
      %p117 = scmp.eq.s32.totalorder %s20, 3
      %p118 = por %p116, %p117
      %p120 = scmp.ne.s32.totalorder %s105, %s119
      %p121 = scmp.eq.s32.totalorder %s20, 0
      %p122 = por %p120, %p121
      %s123 = ssub.s32 %s21, %s33
      %s124 = ssub.s32 %s22, %s29
      %s125 = sor.u32 %s123, %s124
      %p126 = scmp.eq.s32.totalorder %s125, 0
      %s128 = sadd.s32 %s127, 1
      %s129 = scalar_select %p126, %s127, %s128
      %p132 = pneg %p126
      %p133 = scmp.eq.s32.totalorder %s14, 3
      %p134 = por %p132, %p133
      %p135 = scmp.ne.s32.totalorder %s127, %s130
      %p136 = scmp.eq.s32.totalorder %s14, 0
      %p137 = por %p135, %p136
      %p138 = scmp.ne.s32.totalorder %s127, %s130
      %p139 = scmp.eq.s32.totalorder %s19, 3
      %p140 = por %p138, %p139
      %p141 = scmp.ne.s32.totalorder %s130, %s131
      %p142 = scmp.eq.s32.totalorder %s19, 0
      %p143 = por %p141, %p142
      %p144 = scmp.ne.s32.totalorder %s130, %s131
      %p145 = scmp.eq.s32.totalorder %s20, 3
      %p146 = por %p144, %p145
      %p148 = scmp.ne.s32.totalorder %s131, %s147
      %p149 = scmp.eq.s32.totalorder %s20, 0
      %p150 = por %p148, %p149
      %p151 = scmp.le.s32.totalorder 1, %s14
      %p152 = scmp.lt.s32.totalorder %s14, 5
      %p153 = pnand %p151, %p152
      %p154 = pneg %p153
      // Predicated region
      $region9: #{tpu_custom_call.1} parent=5 // pred_check
        _
      $region10: #{tpu_custom_call.1} parent=5 // pred_check_branch
        %156 = sbr.rel (%p153) target = $region12
      $region11: #{tpu_custom_call.1} parent=5 // pred_region
        %s157 = ssub.s32 %s14, 1
        // Predicated region
        $region13: #{tpu_custom_call.1} parent=11 // pred_check
          %p158 = pneg %p73
        $region14: #{tpu_custom_call.1} parent=11 // pred_check_branch
          %160 = sbr.rel (%p158) target = $region16
        $region15: #{tpu_custom_call.1} parent=11 // pred_region
          _
        $region16: #{tpu_custom_call.1} parent=11 // pred_fallthru
          _
        // Predicated region
        $region17: #{tpu_custom_call.1} parent=11 // pred_check
          %p161 = pneg %p94
        $region18: #{tpu_custom_call.1} parent=11 // pred_check_branch
          %163 = sbr.rel (%p161) target = $region20
        $region19: #{tpu_custom_call.1} parent=11 // pred_region
          _
        $region20: #{tpu_custom_call.1} parent=11 // pred_fallthru
          _
        // Predicated region
        $region21: #{tpu_custom_call.1} parent=11 // pred_check
          %p164 = pneg %p115
        $region22: #{tpu_custom_call.1} parent=11 // pred_check_branch
          %166 = sbr.rel (%p164) target = $region24
        $region23: #{tpu_custom_call.1} parent=11 // pred_region
          _
        $region24: #{tpu_custom_call.1} parent=11 // pred_fallthru
          _
      $region12: #{tpu_custom_call.1} parent=5 // pred_fallthru
        _
      %p167 = scmp.lt.s32.totalorder %s14, 4
      // Predicated region
      $region25: #{tpu_custom_call.1} parent=5 // pred_check
        %p168 = pneg %p167
      $region26: #{tpu_custom_call.1} parent=5 // pred_check_branch
        %170 = sbr.rel (%p168) target = $region28
      $region27: #{tpu_custom_call.1} parent=5 // pred_region
        // Predicated region
        $region29: #{tpu_custom_call.1} parent=27 // pred_check
          %p171 = pneg %p46
        $region30: #{tpu_custom_call.1} parent=27 // pred_check_branch
          %173 = sbr.rel (%p171) target = $region32
        $region31: #{tpu_custom_call.1} parent=27 // pred_region
          %p174 = scmp.lt.s32.totalorder %s21, 1
          %s175 = scalar_select %p174, %s21, 1
          %s176 = smul.addr %s175, 8
          %s177 = smul.addr %s176, 8
          %s178 = scalar_lea.vmem %s0, %s177
        $region32: #{tpu_custom_call.1} parent=27 // pred_fallthru
          _
      $region28: #{tpu_custom_call.1} parent=5 // pred_fallthru
        _
      %p179 = scmp.le.s32.totalorder 1, %s14
      %p180 = scmp.lt.s32.totalorder %s14, 5
      %p181 = pnand %p179, %p180
      %p182 = pneg %p181
      // Predicated region
      $region33: #{tpu_custom_call.1} parent=5 // pred_check
        _
      $region34: #{tpu_custom_call.1} parent=5 // pred_check_branch
        %184 = sbr.rel (%p181) target = $region36
      $region35: #{tpu_custom_call.1} parent=5 // pred_region
        %s185 = ssub.s32 %s14, 1
        %p186 = scmp.lt.s32.totalorder %s23, 1
        %s187 = scalar_select %p186, %s23, 1
        %s188 = smul.addr %s187, 8
        %s189 = smul.addr %s188, 8
        %s190 = scalar_lea.vmem %s0, %s189
        %p191 = pneg %p52
        %p192 = pneg %p49
        %p193 = pneg %p73
        %p194 = pneg %p70
        %p195 = pneg %p94
        %p196 = pneg %p91
        %p197 = pneg %p115
        %p198 = pneg %p112
        %p199 = pneg %p143
        %p200 = pneg %p140
        %s201 = sand.u32 %s130, 1
        %s202 = scalar_lea.sflag [#allocation5], %s201
        %s203 = sand.u32 %s130, 1
        %s204 = smul.addr %s203, 32
        %s205 = scalar_lea.vmem [#allocation4], %s204
        %p206 = scmp.lt.s32.totalorder %s23, 1
        %s207 = scalar_select %p206, %s23, 1
        %s208 = smul.addr %s207, 8
        %s209 = smul.addr %s208, 8
        %s210 = scalar_lea.vmem %s0, %s209
        %p211 = scmp.eq.s32.totalorder %s24, 0
        // Predicated region
        $region37: #{tpu_custom_call.1} parent=35 // pred_check
          %p212 = pneg %p211
        $region38: #{tpu_custom_call.1} parent=35 // pred_check_branch
          %214 = sbr.rel (%p212) target = $region40
        $region39: #{tpu_custom_call.1} parent=35 // pred_region
          %v215 = vld [vmem:[%s210] sm:$0xff]
          %v216 = vld [vmem:[%s210 + $0x8] sm:$0xff]
          %v217 = vld [vmem:[%s210 + $0x10] sm:$0xff]
          %v218 = vld [vmem:[%s210 + $0x18] sm:$0xff]
          %v219 = vld [vmem:[%s210 + $0x20] sm:$0xff]
          %v220 = vld [vmem:[%s210 + $0x28] sm:$0xff]
          %v221 = vld [vmem:[%s210 + $0x30] sm:$0xff]
          %v222 = vld [vmem:[%s210 + $0x38] sm:$0xff]
          %v223 = vld [vmem:[%s1] sm:$0xff]
          %v224 = vld [vmem:[%s1 + $0x8] sm:$0xff]
          %v225 = vld [vmem:[%s1 + $0x10] sm:$0xff]
          %v226 = vld [vmem:[%s1 + $0x18] sm:$0xff]
          %v227 = vld [vmem:[%s1 + $0x20] sm:$0xff]
          %v228 = vld [vmem:[%s1 + $0x28] sm:$0xff]
          %v229 = vld [vmem:[%s1 + $0x30] sm:$0xff]
          %v230 = vld [vmem:[%s1 + $0x38] sm:$0xff]
          %v231 = vld [vmem:[%s1 + $0x40] sm:$0x1]
          %v232 = vld [vmem:[%s2] sm:$0xff]
          %v233 = vld [vmem:[%s2 + $0x8] sm:$0xff]
          %v234 = vld [vmem:[%s2 + $0x10] sm:$0xff]
          %v235 = vld [vmem:[%s2 + $0x18] sm:$0xff]
          %v236 = vld [vmem:[%s2 + $0x20] sm:$0xff]
          %v237 = vld [vmem:[%s2 + $0x28] sm:$0xff]
          %v238 = vld [vmem:[%s2 + $0x30] sm:$0xff]
          %v239 = vld [vmem:[%s2 + $0x38] sm:$0xff]
          %v240 = vld [vmem:[%s2 + $0x40] sm:$0x1]
          %242 = vset.pattern.permute.xlu0 0
          %243 = vperm.xlu0 %242, %v232
          %v244 = vpop.permute.xlu0 %243
          %247 = vset.pattern.permute.xlu0 0
          %248 = vperm.xlu0 %247, %v233
          %v249 = vpop.permute.xlu0 %248
          %252 = vset.pattern.permute.xlu0 0
          %253 = vperm.xlu0 %252, %v234
          %v254 = vpop.permute.xlu0 %253
          %257 = vset.pattern.permute.xlu0 0
          %258 = vperm.xlu0 %257, %v235
          %v259 = vpop.permute.xlu0 %258
          %262 = vset.pattern.permute.xlu0 0
          %263 = vperm.xlu0 %262, %v236
          %v264 = vpop.permute.xlu0 %263
          %267 = vset.pattern.permute.xlu0 0
          %268 = vperm.xlu0 %267, %v237
          %v269 = vpop.permute.xlu0 %268
          %272 = vset.pattern.permute.xlu0 0
          %273 = vperm.xlu0 %272, %v238
          %v274 = vpop.permute.xlu0 %273
          %277 = vset.pattern.permute.xlu0 0
          %278 = vperm.xlu0 %277, %v239
          %v279 = vpop.permute.xlu0 %278
          %282 = vset.pattern.permute.xlu0 0
          %283 = vperm.xlu0 %282, %v240
          %v284 = vpop.permute.xlu0 %283
          %vm286 = vcmask 261120
          %v288 = vsel %vm286, %v223, 0
          %v291 = vsel %vm286, %v224, 0
          %v294 = vsel %vm286, %v225, 0
          %v297 = vsel %vm286, %v226, 0
          %v300 = vsel %vm286, %v227, 0
          %v303 = vsel %vm286, %v228, 0
          %v306 = vsel %vm286, %v229, 0
          %v309 = vsel %vm286, %v230, 0
          %v312 = vsel %vm286, %v231, 0
          %314 = vmatpush.msra.mxu0 0.0
          %315 = vmatpush.msra.mxu0 0.0
          %316 = vmatpush.msra.mxu0 0.0
          %317 = vmatpush.msra.mxu0 0.0
          %318 = vmatpush.msra.mxu0 0.0
          %319 = vmatpush.msra.mxu0 0.0
          %320 = vmatpush.msra.mxu0 0.0
          %321 = vmatpush.msra.mxu0 0.0
          %322 = vmatpush.msra.mxu0 0.0
          %323 = vmatpush.msra.mxu0 0.0
          %324 = vmatpush.msra.mxu0 0.0
          %325 = vmatpush.msra.mxu0 0.0
          %326 = vmatpush.msra.mxu0 %v221
          %327 = vmatpush.msra.mxu0 %v219
          %328 = vmatpush.msra.mxu0 %v217
          %329 = vmatpush.msra.mxu0 %v215
          %330 = vmatmul.f32.gmra.mxu0 %v288
          %v331 = vpop.f32.mrf.mxu0
          %v332 = vadd.f32 %v244, %v331
          %333 = vmatmul.f32.gmra.mxu0 %v291
          %v334 = vpop.f32.mrf.mxu0
          %v335 = vadd.f32 %v249, %v334
          %336 = vmatmul.f32.gmra.mxu0 %v294
          %v337 = vpop.f32.mrf.mxu0
          %v338 = vadd.f32 %v254, %v337
          %339 = vmatmul.f32.gmra.mxu0 %v297
          %v340 = vpop.f32.mrf.mxu0
          %v341 = vadd.f32 %v259, %v340
          %342 = vmatmul.f32.gmra.mxu0 %v300
          %v343 = vpop.f32.mrf.mxu0
          %v344 = vadd.f32 %v264, %v343
          %345 = vmatmul.f32.gmra.mxu0 %v303
          %v346 = vpop.f32.mrf.mxu0
          %v347 = vadd.f32 %v269, %v346
          %348 = vmatmul.f32.gmra.mxu0 %v306
          %v349 = vpop.f32.mrf.mxu0
          %v350 = vadd.f32 %v274, %v349
          %351 = vmatmul.f32.gmra.mxu0 %v309
          %v352 = vpop.f32.mrf.mxu0
          %v353 = vadd.f32 %v279, %v352
          %354 = vmatmul.f32.gmra.mxu0 %v312
          %v355 = vpop.f32.mrf.mxu0
          %v356 = vadd.f32 %v284, %v355
          %357 = vdwg.mxu0
          %358 = vmatpush.msra.mxu0 0.0
          %359 = vmatpush.msra.mxu0 0.0
          %360 = vmatpush.msra.mxu0 0.0
          %361 = vmatpush.msra.mxu0 0.0
          %362 = vmatpush.msra.mxu0 0.0
          %363 = vmatpush.msra.mxu0 0.0
          %364 = vmatpush.msra.mxu0 0.0
          %365 = vmatpush.msra.mxu0 0.0
          %366 = vmatpush.msra.mxu0 0.0
          %367 = vmatpush.msra.mxu0 0.0
          %368 = vmatpush.msra.mxu0 0.0
          %369 = vmatpush.msra.mxu0 0.0
          %370 = vmatpush.msra.mxu0 %v222
          %371 = vmatpush.msra.mxu0 %v220
          %372 = vmatpush.msra.mxu0 %v218
          %373 = vmatpush.msra.mxu0 %v216
          %374 = vmatmul.f32.gmra.mxu0 %v288
          %v375 = vpop.f32.mrf.mxu0
          %v376 = vadd.f32 %v244, %v375
          %377 = vmatmul.f32.gmra.mxu0 %v291
          %v378 = vpop.f32.mrf.mxu0
          %v379 = vadd.f32 %v249, %v378
          %380 = vmatmul.f32.gmra.mxu0 %v294
          %v381 = vpop.f32.mrf.mxu0
          %v382 = vadd.f32 %v254, %v381
          %383 = vmatmul.f32.gmra.mxu0 %v297
          %v384 = vpop.f32.mrf.mxu0
          %v385 = vadd.f32 %v259, %v384
          %386 = vmatmul.f32.gmra.mxu0 %v300
          %v387 = vpop.f32.mrf.mxu0
          %v388 = vadd.f32 %v264, %v387
          %389 = vmatmul.f32.gmra.mxu0 %v303
          %v390 = vpop.f32.mrf.mxu0
          %v391 = vadd.f32 %v269, %v390
          %392 = vmatmul.f32.gmra.mxu0 %v306
          %v393 = vpop.f32.mrf.mxu0
          %v394 = vadd.f32 %v274, %v393
          %395 = vmatmul.f32.gmra.mxu0 %v309
          %v396 = vpop.f32.mrf.mxu0
          %v397 = vadd.f32 %v279, %v396
          %398 = vmatmul.f32.gmra.mxu0 %v312
          %v399 = vpop.f32.mrf.mxu0
          %v400 = vadd.f32 %v284, %v399
          %401 = vdwg.mxu0
          %402 = vst [vmem:[#allocation2] sm:$0xff] %v332
          %403 = vst [vmem:[#allocation2 + $0x8] sm:$0xff] %v376
          %404 = vst [vmem:[#allocation2 + $0x10] sm:$0xff] %v335
          %405 = vst [vmem:[#allocation2 + $0x18] sm:$0xff] %v379
          %406 = vst [vmem:[#allocation2 + $0x20] sm:$0xff] %v338
          %407 = vst [vmem:[#allocation2 + $0x28] sm:$0xff] %v382
          %408 = vst [vmem:[#allocation2 + $0x30] sm:$0xff] %v341
          %409 = vst [vmem:[#allocation2 + $0x38] sm:$0xff] %v385
          %410 = vst [vmem:[#allocation2 + $0x40] sm:$0xff] %v344
          %411 = vst [vmem:[#allocation2 + $0x48] sm:$0xff] %v388
          %412 = vst [vmem:[#allocation2 + $0x50] sm:$0xff] %v347
          %413 = vst [vmem:[#allocation2 + $0x58] sm:$0xff] %v391
          %414 = vst [vmem:[#allocation2 + $0x60] sm:$0xff] %v350
          %415 = vst [vmem:[#allocation2 + $0x68] sm:$0xff] %v394
          %416 = vst [vmem:[#allocation2 + $0x70] sm:$0xff] %v353
          %417 = vst [vmem:[#allocation2 + $0x78] sm:$0xff] %v397
          %418 = vst [vmem:[#allocation2 + $0x80] sm:$0x1] %v356
          %419 = vst [vmem:[#allocation2 + $0x88] sm:$0x1] %v400
        $region40: #{tpu_custom_call.1} parent=35 // pred_fallthru
          _
        %s420 = smul.u32 %s24, 128
        %s421 = sshra.s32 %s420, 7
        %s422 = sand.u32 %s420, 127
        %s423 = smul.addr %s421, 8
        %s424 = scalar_lea.vmem [#allocation2], %s423
        %v425 = vld [vmem:[%s424] sm:$0xf]
        %v426 = vld [vmem:[#allocation2 + $0x20] sm:$0xf]
        %v427 = vld [vmem:[#allocation2 + $0x28] sm:$0xf]
        %v428 = vld [vmem:[#allocation2 + $0x40] sm:$0xff]
        %v429 = vld [vmem:[#allocation2 + $0x48] sm:$0xff]
        %v430 = vld [vmem:[#allocation2 + $0x50] sm:$0xff]
        %v431 = vld [vmem:[#allocation2 + $0x58] sm:$0xff]
        %v432 = vld [vmem:[#allocation2 + $0x60] sm:$0xff]
        %v433 = vld [vmem:[#allocation2 + $0x68] sm:$0xff]
        %v434 = vld [vmem:[#allocation2 + $0x70] sm:$0xff]
        %v435 = vld [vmem:[#allocation2 + $0x78] sm:$0xff]
        %v436 = vld [vmem:[#allocation2 + $0x80] sm:$0x1]
        %v437 = vld [vmem:[#allocation2 + $0x88] sm:$0x1]
        %438 = vxpose.xlu0.b32.start [1/16] %v425, 128
        %439 = vxpose.xlu0.b32.cont [2/16] 0.0, 128
        %440 = vxpose.xlu0.b32.cont [3/16] 0.0, 128
        %441 = vxpose.xlu0.b32.cont [4/16] 0.0, 128
        %442 = vxpose.xlu0.b32.cont [5/16] 0.0, 128
        %443 = vxpose.xlu0.b32.cont [6/16] 0.0, 128
        %444 = vxpose.xlu0.b32.cont [7/16] 0.0, 128
        %445 = vxpose.xlu0.b32.cont [8/16] 0.0, 128
        %446 = vxpose.xlu0.b32.cont [9/16] 0.0, 128
        %447 = vxpose.xlu0.b32.cont [10/16] 0.0, 128
        %448 = vxpose.xlu0.b32.cont [11/16] 0.0, 128
        %449 = vxpose.xlu0.b32.cont [12/16] 0.0, 128
        %450 = vxpose.xlu0.b32.cont [13/16] 0.0, 128
        %451 = vxpose.xlu0.b32.cont [14/16] 0.0, 128
        %452 = vxpose.xlu0.b32.cont [15/16] 0.0, 128
        %453 = vxpose.xlu0.b32.end [16/16] 0.0, 128
        %v454 = vpop.trf.xlu0
        %v455 = vpop.trf.xlu0
        %v456 = vpop.trf.xlu0
        %v457 = vpop.trf.xlu0
        %v458 = vpop.trf.xlu0
        %v459 = vpop.trf.xlu0
        %v460 = vpop.trf.xlu0
        %v461 = vpop.trf.xlu0
        %v462 = vpop.trf.xlu0
        %v463 = vpop.trf.xlu0
        %v464 = vpop.trf.xlu0
        %v465 = vpop.trf.xlu0
        %v466 = vpop.trf.xlu0
        %v467 = vpop.trf.xlu0
        %v468 = vpop.trf.xlu0
        %v469 = vpop.trf.xlu0
        %vm470 = vcmask 31744
        %v472 = vsel %vm470, %v454, 0
        %v475 = vsel %vm470, %v455, 0
        %v478 = vsel %vm470, %v456, 0
        %v481 = vsel %vm470, %v457, 0
        %v484 = vsel %vm470, %v458, 0
        %v487 = vsel %vm470, %v459, 0
        %v490 = vsel %vm470, %v460, 0
        %v493 = vsel %vm470, %v461, 0
        %v496 = vsel %vm470, %v462, 0
        %v499 = vsel %vm470, %v463, 0
        %v502 = vsel %vm470, %v464, 0
        %v505 = vsel %vm470, %v465, 0
        %v508 = vsel %vm470, %v466, 0
        %v511 = vsel %vm470, %v467, 0
        %v514 = vsel %vm470, %v468, 0
        %v517 = vsel %vm470, %v469, 0
        %vm519 = vcmask 1043456
        %v521 = vsel %vm519, %v426, 0
        %v524 = vsel %vm519, %v427, 0
        %526 = vmatpush.msra.mxu0 0.0
        %527 = vmatpush.msra.mxu0 0.0
        %528 = vmatpush.msra.mxu0 0.0
        %529 = vmatpush.msra.mxu0 0.0
        %530 = vmatpush.msra.mxu0 0.0
        %531 = vmatpush.msra.mxu0 0.0
        %532 = vmatpush.msra.mxu0 0.0
        %533 = vmatpush.msra.mxu0 0.0
        %534 = vmatpush.msra.mxu0 0.0
        %535 = vmatpush.msra.mxu0 0.0
        %536 = vmatpush.msra.mxu0 0.0
        %537 = vmatpush.msra.mxu0 0.0
        %538 = vmatpush.msra.mxu0 0.0
        %539 = vmatpush.msra.mxu0 0.0
        %540 = vmatpush.msra.mxu0 0.0
        %541 = vmatpush.msra.mxu0 %v521
        %542 = vmatmul.f32.gmra.mxu0 %v472
        %v543 = vpop.f32.mrf.mxu0
        %v544 = vadd.f32 0.0, %v543
        %545 = vmatmul.f32.gmra.mxu0 %v475
        %v546 = vpop.f32.mrf.mxu0
        %v547 = vadd.f32 0.0, %v546
        %548 = vmatmul.f32.gmra.mxu0 %v478
        %v549 = vpop.f32.mrf.mxu0
        %v550 = vadd.f32 0.0, %v549
        %551 = vmatmul.f32.gmra.mxu0 %v481
        %v552 = vpop.f32.mrf.mxu0
        %v553 = vadd.f32 0.0, %v552
        %554 = vmatmul.f32.gmra.mxu0 %v484
        %v555 = vpop.f32.mrf.mxu0
        %v556 = vadd.f32 0.0, %v555
        %557 = vmatmul.f32.gmra.mxu0 %v487
        %v558 = vpop.f32.mrf.mxu0
        %v559 = vadd.f32 0.0, %v558
        %560 = vmatmul.f32.gmra.mxu0 %v490
        %v561 = vpop.f32.mrf.mxu0
        %v562 = vadd.f32 0.0, %v561
        %563 = vmatmul.f32.gmra.mxu0 %v493
        %v564 = vpop.f32.mrf.mxu0
        %v565 = vadd.f32 0.0, %v564
        %566 = vmatmul.f32.gmra.mxu0 %v496
        %v567 = vpop.f32.mrf.mxu0
        %v568 = vadd.f32 0.0, %v567
        %569 = vmatmul.f32.gmra.mxu0 %v499
        %v570 = vpop.f32.mrf.mxu0
        %v571 = vadd.f32 0.0, %v570
        %572 = vmatmul.f32.gmra.mxu0 %v502
        %v573 = vpop.f32.mrf.mxu0
        %v574 = vadd.f32 0.0, %v573
        %575 = vmatmul.f32.gmra.mxu0 %v505
        %v576 = vpop.f32.mrf.mxu0
        %v577 = vadd.f32 0.0, %v576
        %578 = vmatmul.f32.gmra.mxu0 %v508
        %v579 = vpop.f32.mrf.mxu0
        %v580 = vadd.f32 0.0, %v579
        %581 = vmatmul.f32.gmra.mxu0 %v511
        %v582 = vpop.f32.mrf.mxu0
        %v583 = vadd.f32 0.0, %v582
        %584 = vmatmul.f32.gmra.mxu0 %v514
        %v585 = vpop.f32.mrf.mxu0
        %v586 = vadd.f32 0.0, %v585
        %587 = vmatmul.f32.gmra.mxu0 %v517
        %v588 = vpop.f32.mrf.mxu0
        %v589 = vadd.f32 0.0, %v588
        %590 = vdwg.mxu0
        %591 = vmatpush.msra.mxu0 0.0
        %592 = vmatpush.msra.mxu0 0.0
        %593 = vmatpush.msra.mxu0 0.0
        %594 = vmatpush.msra.mxu0 0.0
        %595 = vmatpush.msra.mxu0 0.0
        %596 = vmatpush.msra.mxu0 0.0
        %597 = vmatpush.msra.mxu0 0.0
        %598 = vmatpush.msra.mxu0 0.0
        %599 = vmatpush.msra.mxu0 0.0
        %600 = vmatpush.msra.mxu0 0.0
        %601 = vmatpush.msra.mxu0 0.0
        %602 = vmatpush.msra.mxu0 0.0
        %603 = vmatpush.msra.mxu0 0.0
        %604 = vmatpush.msra.mxu0 0.0
        %605 = vmatpush.msra.mxu0 0.0
        %606 = vmatpush.msra.mxu0 %v524
        %607 = vmatmul.f32.gmra.mxu0 %v472
        %v608 = vpop.f32.mrf.mxu0
        %v609 = vadd.f32 0.0, %v608
        %610 = vmatmul.f32.gmra.mxu0 %v475
        %v611 = vpop.f32.mrf.mxu0
        %v612 = vadd.f32 0.0, %v611
        %613 = vmatmul.f32.gmra.mxu0 %v478
        %v614 = vpop.f32.mrf.mxu0
        %v615 = vadd.f32 0.0, %v614
        %616 = vmatmul.f32.gmra.mxu0 %v481
        %v617 = vpop.f32.mrf.mxu0
        %v618 = vadd.f32 0.0, %v617
        %619 = vmatmul.f32.gmra.mxu0 %v484
        %v620 = vpop.f32.mrf.mxu0
        %v621 = vadd.f32 0.0, %v620
        %622 = vmatmul.f32.gmra.mxu0 %v487
        %v623 = vpop.f32.mrf.mxu0
        %v624 = vadd.f32 0.0, %v623
        %625 = vmatmul.f32.gmra.mxu0 %v490
        %v626 = vpop.f32.mrf.mxu0
        %v627 = vadd.f32 0.0, %v626
        %628 = vmatmul.f32.gmra.mxu0 %v493
        %v629 = vpop.f32.mrf.mxu0
        %v630 = vadd.f32 0.0, %v629
        %631 = vmatmul.f32.gmra.mxu0 %v496
        %v632 = vpop.f32.mrf.mxu0
        %v633 = vadd.f32 0.0, %v632
        %634 = vmatmul.f32.gmra.mxu0 %v499
        %v635 = vpop.f32.mrf.mxu0
        %v636 = vadd.f32 0.0, %v635
        %637 = vmatmul.f32.gmra.mxu0 %v502
        %v638 = vpop.f32.mrf.mxu0
        %v639 = vadd.f32 0.0, %v638
        %640 = vmatmul.f32.gmra.mxu0 %v505
        %v641 = vpop.f32.mrf.mxu0
        %v642 = vadd.f32 0.0, %v641
        %643 = vmatmul.f32.gmra.mxu0 %v508
        %v644 = vpop.f32.mrf.mxu0
        %v645 = vadd.f32 0.0, %v644
        %646 = vmatmul.f32.gmra.mxu0 %v511
        %v647 = vpop.f32.mrf.mxu0
        %v648 = vadd.f32 0.0, %v647
        %649 = vmatmul.f32.gmra.mxu0 %v514
        %v650 = vpop.f32.mrf.mxu0
        %v651 = vadd.f32 0.0, %v650
        %652 = vmatmul.f32.gmra.mxu0 %v517
        %v653 = vpop.f32.mrf.mxu0
        %v654 = vadd.f32 0.0, %v653
        %655 = vdwg.mxu0
        %v656 = vmax.f32 %v544, %v609
        %657 = vmax.xlane.f32.xlu0 %v656
        %v658 = vpop.xlane.xlu0 %657
        %v659 = vmax.f32 %v547, %v612
        %660 = vmax.xlane.f32.xlu0 %v659
        %v661 = vpop.xlane.xlu0 %660
        %v662 = vmax.f32 %v550, %v615
        %663 = vmax.xlane.f32.xlu0 %v662
        %v664 = vpop.xlane.xlu0 %663
        %v665 = vmax.f32 %v553, %v618
        %666 = vmax.xlane.f32.xlu0 %v665
        %v667 = vpop.xlane.xlu0 %666
        %v668 = vmax.f32 %v556, %v621
        %669 = vmax.xlane.f32.xlu0 %v668
        %v670 = vpop.xlane.xlu0 %669
        %v671 = vmax.f32 %v559, %v624
        %672 = vmax.xlane.f32.xlu0 %v671
        %v673 = vpop.xlane.xlu0 %672
        %v674 = vmax.f32 %v562, %v627
        %675 = vmax.xlane.f32.xlu0 %v674
        %v676 = vpop.xlane.xlu0 %675
        %v677 = vmax.f32 %v565, %v630
        %678 = vmax.xlane.f32.xlu0 %v677
        %v679 = vpop.xlane.xlu0 %678
        %v680 = vmax.f32 %v568, %v633
        %681 = vmax.xlane.f32.xlu0 %v680
        %v682 = vpop.xlane.xlu0 %681
        %v683 = vmax.f32 %v571, %v636
        %684 = vmax.xlane.f32.xlu0 %v683
        %v685 = vpop.xlane.xlu0 %684
        %v686 = vmax.f32 %v574, %v639
        %687 = vmax.xlane.f32.xlu0 %v686
        %v688 = vpop.xlane.xlu0 %687
        %v689 = vmax.f32 %v577, %v642
        %690 = vmax.xlane.f32.xlu0 %v689
        %v691 = vpop.xlane.xlu0 %690
        %v692 = vmax.f32 %v580, %v645
        %693 = vmax.xlane.f32.xlu0 %v692
        %v694 = vpop.xlane.xlu0 %693
        %v695 = vmax.f32 %v583, %v648
        %696 = vmax.xlane.f32.xlu0 %v695
        %v697 = vpop.xlane.xlu0 %696
        %v698 = vmax.f32 %v586, %v651
        %699 = vmax.xlane.f32.xlu0 %v698
        %v700 = vpop.xlane.xlu0 %699
        %v701 = vmax.f32 %v589, %v654
        %702 = vmax.xlane.f32.xlu0 %v701
        %v703 = vpop.xlane.xlu0 %702
        %v704 = vsub.f32 %v544, %v658
        %v705 = vsub.f32 %v609, %v658
        %v706 = vsub.f32 %v547, %v661
        %v707 = vsub.f32 %v612, %v661
        %v708 = vsub.f32 %v550, %v664
        %v709 = vsub.f32 %v615, %v664
        %v710 = vsub.f32 %v553, %v667
        %v711 = vsub.f32 %v618, %v667
        %v712 = vsub.f32 %v556, %v670
        %v713 = vsub.f32 %v621, %v670
        %v714 = vsub.f32 %v559, %v673
        %v715 = vsub.f32 %v624, %v673
        %v716 = vsub.f32 %v562, %v676
        %v717 = vsub.f32 %v627, %v676
        %v718 = vsub.f32 %v565, %v679
        %v719 = vsub.f32 %v630, %v679
        %v720 = vsub.f32 %v568, %v682
        %v721 = vsub.f32 %v633, %v682
        %v722 = vsub.f32 %v571, %v685
        %v723 = vsub.f32 %v636, %v685
        %v724 = vsub.f32 %v574, %v688
        %v725 = vsub.f32 %v639, %v688
        %v726 = vsub.f32 %v577, %v691
        %v727 = vsub.f32 %v642, %v691
        %v728 = vsub.f32 %v580, %v694
        %v729 = vsub.f32 %v645, %v694
        %v730 = vsub.f32 %v583, %v697
        %v731 = vsub.f32 %v648, %v697
        %v732 = vsub.f32 %v586, %v700
        %v733 = vsub.f32 %v651, %v700
        %v734 = vsub.f32 %v589, %v703
        %v735 = vsub.f32 %v654, %v703
        %v736 = vmul.f32 %v704, 1.442695
        %v737 = vpow.pop %v736
        %v738 = vmul.f32 %v705, 1.442695
        %v739 = vpow.pop %v738
        %v740 = vmul.f32 %v706, 1.442695
        %v741 = vpow.pop %v740
        %v742 = vmul.f32 %v707, 1.442695
        %v743 = vpow.pop %v742
        %v744 = vmul.f32 %v708, 1.442695
        %v745 = vpow.pop %v744
        %v746 = vmul.f32 %v709, 1.442695
        %v747 = vpow.pop %v746
        %v748 = vmul.f32 %v710, 1.442695
        %v749 = vpow.pop %v748
        %v750 = vmul.f32 %v711, 1.442695
        %v751 = vpow.pop %v750
        %v752 = vmul.f32 %v712, 1.442695
        %v753 = vpow.pop %v752
        %v754 = vmul.f32 %v713, 1.442695
        %v755 = vpow.pop %v754
        %v756 = vmul.f32 %v714, 1.442695
        %v757 = vpow.pop %v756
        %v758 = vmul.f32 %v715, 1.442695
        %v759 = vpow.pop %v758
        %v760 = vmul.f32 %v716, 1.442695
        %v761 = vpow.pop %v760
        %v762 = vmul.f32 %v717, 1.442695
        %v763 = vpow.pop %v762
        %v764 = vmul.f32 %v718, 1.442695
        %v765 = vpow.pop %v764
        %v766 = vmul.f32 %v719, 1.442695
        %v767 = vpow.pop %v766
        %v768 = vmul.f32 %v720, 1.442695
        %v769 = vpow.pop %v768
        %v770 = vmul.f32 %v721, 1.442695
        %v771 = vpow.pop %v770
        %v772 = vmul.f32 %v722, 1.442695
        %v773 = vpow.pop %v772
        %v774 = vmul.f32 %v723, 1.442695
        %v775 = vpow.pop %v774
        %v776 = vmul.f32 %v724, 1.442695
        %v777 = vpow.pop %v776
        %v778 = vmul.f32 %v725, 1.442695
        %v779 = vpow.pop %v778
        %v780 = vmul.f32 %v726, 1.442695
        %v781 = vpow.pop %v780
        %v782 = vmul.f32 %v727, 1.442695
        %v783 = vpow.pop %v782
        %v784 = vmul.f32 %v728, 1.442695
        %v785 = vpow.pop %v784
        %v786 = vmul.f32 %v729, 1.442695
        %v787 = vpow.pop %v786
        %v788 = vmul.f32 %v730, 1.442695
        %v789 = vpow.pop %v788
        %v790 = vmul.f32 %v731, 1.442695
        %v791 = vpow.pop %v790
        %v792 = vmul.f32 %v732, 1.442695
        %v793 = vpow.pop %v792
        %v794 = vmul.f32 %v733, 1.442695
        %v795 = vpow.pop %v794
        %v796 = vmul.f32 %v734, 1.442695
        %v797 = vpow.pop %v796
        %v798 = vmul.f32 %v735, 1.442695
        %v799 = vpow.pop %v798
        %800 = vmatpush.xpose.msra.mxu0 %v797
        %801 = vmatpush.xpose.msra.mxu0 %v793
        %802 = vmatpush.xpose.msra.mxu0 %v789
        %803 = vmatpush.xpose.msra.mxu0 %v785
        %804 = vmatpush.xpose.msra.mxu0 %v781
        %805 = vmatpush.xpose.msra.mxu0 %v777
        %806 = vmatpush.xpose.msra.mxu0 %v773
        %807 = vmatpush.xpose.msra.mxu0 %v769
        %808 = vmatpush.xpose.msra.mxu0 %v765
        %809 = vmatpush.xpose.msra.mxu0 %v761
        %810 = vmatpush.xpose.msra.mxu0 %v757
        %811 = vmatpush.xpose.msra.mxu0 %v753
        %812 = vmatpush.xpose.msra.mxu0 %v749
        %813 = vmatpush.xpose.msra.mxu0 %v745
        %814 = vmatpush.xpose.msra.mxu0 %v741
        %815 = vmatpush.xpose.msra.mxu0 %v737
        %816 = vmatmul.f32.gmra.mxu0 %v428
        %v817 = vpop.f32.mrf.mxu0
        %v818 = vadd.f32 0.0, %v817
        %819 = vmatmul.f32.gmra.mxu0 %v430
        %v820 = vpop.f32.mrf.mxu0
        %v821 = vadd.f32 0.0, %v820
        %822 = vmatmul.f32.gmra.mxu0 %v432
        %v823 = vpop.f32.mrf.mxu0
        %v824 = vadd.f32 0.0, %v823
        %825 = vmatmul.f32.gmra.mxu0 %v434
        %v826 = vpop.f32.mrf.mxu0
        %v827 = vadd.f32 0.0, %v826
        %828 = vmatmul.f32.gmra.mxu0 %v436
        %v829 = vpop.f32.mrf.mxu0
        %v830 = vadd.f32 0.0, %v829
        %831 = vdwg.mxu0
        %832 = vmatpush.xpose.msra.mxu0 %v799
        %833 = vmatpush.xpose.msra.mxu0 %v795
        %834 = vmatpush.xpose.msra.mxu0 %v791
        %835 = vmatpush.xpose.msra.mxu0 %v787
        %836 = vmatpush.xpose.msra.mxu0 %v783
        %837 = vmatpush.xpose.msra.mxu0 %v779
        %838 = vmatpush.xpose.msra.mxu0 %v775
        %839 = vmatpush.xpose.msra.mxu0 %v771
        %840 = vmatpush.xpose.msra.mxu0 %v767
        %841 = vmatpush.xpose.msra.mxu0 %v763
        %842 = vmatpush.xpose.msra.mxu0 %v759
        %843 = vmatpush.xpose.msra.mxu0 %v755
        %844 = vmatpush.xpose.msra.mxu0 %v751
        %845 = vmatpush.xpose.msra.mxu0 %v747
        %846 = vmatpush.xpose.msra.mxu0 %v743
        %847 = vmatpush.xpose.msra.mxu0 %v739
        %848 = vmatmul.f32.gmra.mxu0 %v429
        %v849 = vpop.f32.mrf.mxu0
        %v850 = vadd.f32 %v818, %v849
        %851 = vmatmul.f32.gmra.mxu0 %v431
        %v852 = vpop.f32.mrf.mxu0
        %v853 = vadd.f32 %v821, %v852
        %854 = vmatmul.f32.gmra.mxu0 %v433
        %v855 = vpop.f32.mrf.mxu0
        %v856 = vadd.f32 %v824, %v855
        %857 = vmatmul.f32.gmra.mxu0 %v435
        %v858 = vpop.f32.mrf.mxu0
        %v859 = vadd.f32 %v827, %v858
        %860 = vmatmul.f32.gmra.mxu0 %v437
        %v861 = vpop.f32.mrf.mxu0
        %v862 = vadd.f32 %v830, %v861
        %863 = vdwg.mxu0
        %v864 = vrcp.pop %v862
        %v865 = vmul.f32 %v862, %v864
        %v866 = vsub.f32 1.0, %v865
        %v867 = vmul.f32 %v864, %v866
        %v868 = vadd.f32 %v864, %v867
        %vm869 = vweird.f32 %v862
        %vm870 = vweird.f32 %v864
        %vm871 = vmor %vm869, %vm870
        %v872 = vsel %vm871, %v864, %v868
        %v873 = vand.u32 2147483647, %v862
        %vm874 = vcmp.eq.f32.partialorder %v873, 8.507059e+37
        %v875 = vand.u32 %v862, 2147483648
        %v876 = vor.u32 1.1754944e-38, %v875
        %v877 = vsel %vm874, %v876, %v872
        %s878 = smul.addr %s421, 8
        %s879 = scalar_lea.vmem %s210, %s878
        %v880 = vld [vmem:[%s879] sm:$0xff]
        %v881 = vld [vmem:[%s879 + $0x10] sm:$0xff]
        %v882 = vld [vmem:[%s879 + $0x20] sm:$0xff]
        %v883 = vld [vmem:[%s879 + $0x30] sm:$0xff]
        %s884 = sld [smem:[#allocation3]]
        %v885 = vperm.slane %v877, 0
        %v886 = vmul.f32 %v850, %v885
        %v887 = vmul.f32 %v853, %v885
        %v888 = vmul.f32 %v856, %v885
        %v889 = vmul.f32 %v859, %v885
        %v890 = vstv %s884
        %v891 = vmul.f32 %v890, %v886
        %v892 = vmul.f32 %v890, %v887
        %v893 = vmul.f32 %v890, %v888
        %v894 = vmul.f32 %v890, %v889
        %v895 = vadd.f32 %v891, %v880
        %v896 = vadd.f32 %v892, %v881
        %v897 = vadd.f32 %v893, %v882
        %v898 = vadd.f32 %v894, %v883
        %899 = vst [vmem:[%s205] sm:$0xff] %v895
        %900 = vst [vmem:[%s205 + $0x8] sm:$0xff] %v896
        %901 = vst [vmem:[%s205 + $0x10] sm:$0xff] %v897
        %902 = vst [vmem:[%s205 + $0x18] sm:$0xff] %v898
        %s903 = sand.u32 %s130, 1
        %s904 = scalar_lea.sflag [#allocation5], %s903
        %s905 = sand.u32 %s130, 1
        %s906 = smul.addr %s905, 32
        %s907 = scalar_lea.vmem [#allocation4], %s906
        // Predicated region
        $region41: #{tpu_custom_call.1} parent=35 // pred_check
          %p908 = pneg %p140
        $region42: #{tpu_custom_call.1} parent=35 // pred_check_branch
          %910 = sbr.rel (%p908) target = $region44
        $region43: #{tpu_custom_call.1} parent=35 // pred_region
          %912 = vsyncadd %s904, 0
          %s913 = smul.addr %s23, 8
          %s914 = sadd.s32 %s24, %s913
          %s915 = smul.addr %s914, 8
          %s916 = scalar_lea.hbm %s4, %s915
          %s917 = sshll.u32 %s907, 4
          %s918 = int_to_ptr.vmem [resolvable:$true] %s917
          %s919 = sshll.u32 %s916, 4
          %s920 = int_to_ptr.hbm [resolvable:$true] %s919
          %925 = dma.vmem_to_hbm [thread:$0]  %s918, 512, %s920, %s904, 128, 256, 8
        $region44: #{tpu_custom_call.1} parent=35 // pred_fallthru
          _
      $region36: #{tpu_custom_call.1} parent=5 // pred_fallthru
        _
      %p926 = scmp.le.s32.totalorder 2, %s14
      // Predicated region
      $region45: #{tpu_custom_call.1} parent=5 // pred_check
        %p927 = pneg %p926
      $region46: #{tpu_custom_call.1} parent=5 // pred_check_branch
        %929 = sbr.rel (%p927) target = $region48
      $region47: #{tpu_custom_call.1} parent=5 // pred_region
        %s930 = ssub.s32 %s14, 2
        // Predicated region
        $region49: #{tpu_custom_call.1} parent=47 // pred_check
          %p931 = pneg %p146
        $region50: #{tpu_custom_call.1} parent=47 // pred_check_branch
          %933 = sbr.rel (%p931) target = $region52
        $region51: #{tpu_custom_call.1} parent=47 // pred_region
          %s934 = sand.u32 %s131, 1
          %s935 = scalar_lea.sflag [#allocation5], %s934
          %s936 = sand.u32 %s131, 1
          %s937 = smul.addr %s936, 32
          %s938 = scalar_lea.vmem [#allocation4], %s937
          %940 = dma.done %s935, 512
        $region52: #{tpu_custom_call.1} parent=47 // pred_fallthru
          _
      $region48: #{tpu_custom_call.1} parent=5 // pred_fallthru
        _
    $region6: #{tpu_custom_call.1} parent=1 // loop_footer
      %s18 = sadd.s32 1, %s14
    $region7: #{tpu_custom_call.1} parent=1 // loop_footer_branch
      %13 = sbr.rel target = $region3
    $region8: #{tpu_custom_call.1} parent=1 // loop_exit
      _
    %941 = vsyncpa [#allocation5], 1
    %s942 = scalar_lea.sflag [#allocation5], 1
    %943 = vsyncpa %s942, 1

</llo_original>
